<compile_context>
chip_gen: v7x
topology: tpu7x:2x2x1
jax: 0.10.0
libtpu: 0.0.40
codegen_flags: <defaults>
</compile_context>

<pallas_src>
import functools

import jax
import jax.numpy as jnp
from jax.experimental import pallas as pl
from jax.experimental.pallas import tpu as pltpu

# fc1..fc7 output widths and activations from the PyTorch module.
DIMS = [256, 128, 64, 56, 48, 32, 1]
ACTS = ("silu", "relu", "silu", "relu", "silu", "silu", "sigmoid")

_LANE = 128
_SUBLANE = 8


def _round_up(n, m):
    return (n + m - 1) // m * m


def _sigmoid(x):
    # One EUP op (tanh) instead of exp + reciprocal.
    return 0.5 * (jnp.tanh(0.5 * x) + 1.0)


def _mlp_kernel(layout, acts, compute_dtype, x_ref, wp_ref, bp_ref, o_ref):
    """Fused 7-layer MLP on one [TB, input_dim] batch tile.

    layout: static per-layer (row_off, k, out_cols, bias_off) into the packed
    weight slab / bias row.  All offsets are (8,128)-tile aligned.
    """
    f32 = jnp.float32
    n_layers = len(layout)

    h = x_ref[...].astype(compute_dtype)
    for i, ((r0, k, cols, b0), act) in enumerate(zip(layout, acts)):
        w = wp_ref[r0:r0 + k, 0:cols]                        # static, aligned
        bv = bp_ref[:, b0:b0 + cols].astype(f32)             # [1, cols] bcast
        y = jnp.dot(h, w, preferred_element_type=f32) + bv   # MXU, f32 accum
        if act == "silu":
            a = y * _sigmoid(y)
        elif act == "relu":
            a = jnp.maximum(y, 0.0)
        else:  # sigmoid
            a = _sigmoid(y)
        # Carry activations in the weight dtype (halves vreg/VMEM traffic on
        # v6e/v7x); keep the final layer's result in f32 for the output store.
        h = a if i == n_layers - 1 else a.astype(compute_dtype)

    # TODO(synk): [TB,1] store is a masked vst; emit a lane-dense slab only if
    # profiling ever shows epilogue stalls (output is only 4*TB bytes/tile).
    o_ref[...] = h[:, :1].astype(o_ref.dtype)


def pack_params(params, input_dim, weight_dtype=jnp.bfloat16):
    """Pack the 7 (w, b) pairs into one zero-padded weight slab and one bias
    row (8/128-aligned layer offsets) plus the static slice layout."""
    in_dims = [input_dim] + DIMS[:-1]
    out_pads = [_round_up(d, _LANE) for d in DIMS]
    # Rows each layer's slab occupies = padded width of its incoming activation.
    row_pads = [_round_up(input_dim, _SUBLANE)] + out_pads[:-1]
    # Width of the activation actually fed to each layer's matmul.
    k_dims = [input_dim] + out_pads[:-1]

    total_rows = sum(row_pads)
    max_cols = max(out_pads)
    total_bias = sum(out_pads)

    wp = jnp.zeros((total_rows, max_cols), weight_dtype)
    bp = jnp.zeros((1, total_bias), jnp.float32)

    layout = []
    r = c = 0
    for (w, b), in_d, out_d, row_pad, out_pad, k in zip(
            params, in_dims, DIMS, row_pads, out_pads, k_dims):
        assert w.shape == (in_d, out_d), (w.shape, in_d, out_d)
        wp = wp.at[r:r + in_d, :out_d].set(w.astype(weight_dtype))
        bp = bp.at[0, c:c + out_d].set(b.reshape(-1).astype(jnp.float32))
        layout.append((r, k, out_pad, c))
        r += row_pad
        c += out_pad
    return wp, bp, tuple(layout)


def hypertension_risk_forward(x, params, *, weight_dtype=jnp.bfloat16,
                              block_b=1024):
    """Fused MLP forward.

    block_b: batch tile in rows.  The whole working set is <3 MB even at
    block_b=2048, far below every generation's scoped-VMEM default, so prefer
    LARGE tiles (512-2048) on v5e/v6e/v7x alike — the costs that matter are
    the ~0.35us per-grid-step overhead and MXU fill/drain of seven tiny serial
    matmuls, both amortized by more rows per tile.
    weight_dtype: bf16 by default (native MXU rate everywhere, f32 accum);
    pass jnp.float32 for a bit-tighter match to the f32 PyTorch module.
    """
    B, input_dim = x.shape
    out_dtype = x.dtype

    # Batch tile: multiple of 8 regardless of caller input.
    tb = _round_up(min(block_b, B), _SUBLANE)
    Bp = _round_up(B, tb)
    # Guarantee >=2 grid steps when there is enough batch to split, so the
    # "parallel" batch axis actually lands on both TensorCores on v7x.
    if Bp // tb < 2 and B >= 2 * _SUBLANE:
        tb = _round_up(-(-B // 2), _SUBLANE)
        Bp = _round_up(B, tb)
    xp = x if Bp == B else jnp.pad(x, ((0, Bp - B), (0, 0)))

    wp, bp, layout = pack_params(params, input_dim, weight_dtype)
    kernel = functools.partial(_mlp_kernel, layout, ACTS, weight_dtype)

    # Advisory cost estimate for XLA scheduling around the custom call.
    layer_dims = list(zip([input_dim] + DIMS[:-1], DIMS))
    flops = 2 * Bp * sum(i * o for i, o in layer_dims)
    transcendentals = Bp * (256 + 64 + 48 + 32 + 1)  # one tanh per SiLU/sigmoid
    bytes_accessed = (Bp * (input_dim + 1) * x.dtype.itemsize
                      + wp.size * wp.dtype.itemsize
                      + bp.size * bp.dtype.itemsize)

    out = pl.pallas_call(
        kernel,
        out_shape=jax.ShapeDtypeStruct((Bp, 1), out_dtype),
        grid=(Bp // tb,),
        in_specs=[
            pl.BlockSpec((tb, input_dim), lambda i: (i, 0)),
            # Full-shape, constant-index blocks -> DMA'd once, VMEM-resident.
            pl.BlockSpec(wp.shape, lambda i: (0, 0)),
            pl.BlockSpec(bp.shape, lambda i: (0, 0)),
        ],
        out_specs=pl.BlockSpec((tb, 1), lambda i: (i, 0)),
        compiler_params=pltpu.CompilerParams(
            dimension_semantics=("parallel",)),
        cost_estimate=pl.CostEstimate(
            flops=flops, transcendentals=transcendentals,
            bytes_accessed=bytes_accessed),
    )(xp, wp, bp)
    return out[:B]


def init_params(key, input_dim, dtype=jnp.float32):
    """PyTorch-default-style init: U(-1/sqrt(fan_in), 1/sqrt(fan_in)).
    Weights are stored [in, out] (transpose of torch's [out, in]) for x @ W."""
    params = []
    in_dim = input_dim
    for out_dim in DIMS:
        key, kw, kb = jax.random.split(key, 3)
        bound = float(1.0 / (in_dim ** 0.5))
        w = jax.random.uniform(kw, (in_dim, out_dim), dtype, -bound, bound)
        b = jax.random.uniform(kb, (out_dim,), dtype, -bound, bound)
        params.append((w, b))
        in_dim = out_dim
    return params


def reference_forward(x, params, matmul_dtype=None):
    """Pure-JAX reference matching the PyTorch forward.  matmul_dtype mirrors
    the kernel's bf16 MXU path (cast lhs/rhs, keep f32 accumulation)."""
    acts = [jax.nn.silu, jax.nn.relu, jax.nn.silu, jax.nn.relu,
            jax.nn.silu, jax.nn.silu, jax.nn.sigmoid]
    h = x.astype(jnp.float32)
    for (w, b), act in zip(params, acts):
        lhs = h if matmul_dtype is None else h.astype(matmul_dtype)
        rhs = w if matmul_dtype is None else w.astype(matmul_dtype)
        y = jnp.dot(lhs, rhs, preferred_element_type=jnp.float32) \
            + b.reshape(1, -1).astype(jnp.float32)
        h = act(y)
    return h.astype(x.dtype)


if __name__ == "__main__":
    key = jax.random.PRNGKey(0)
    key, kx = jax.random.split(key)

    input_dim = 32
    params = init_params(key, input_dim, jnp.float32)

    # 1) f32 weights, small single-tile batch — tight check vs reference.
    batch = 8
    x = jax.random.normal(kx, (batch, input_dim), jnp.float32)
    out = jax.block_until_ready(
        hypertension_risk_forward(x, params, weight_dtype=jnp.float32))
    ref = reference_forward(x, params)
    assert out.shape == (batch, 1), out.shape
    assert jnp.allclose(out, ref, atol=1e-4, rtol=1e-4), "f32 mismatch vs ref"

    # 2) Default bf16 MXU path, padded multi-tile batch grid
    #    (300 rows -> 2 tiles of 152 rows; >=2 steps for v7x megacore).
    key, kx2 = jax.random.split(key)
    batch2 = 300
    x2 = jax.random.normal(kx2, (batch2, input_dim), jnp.float32)
    out2 = jax.block_until_ready(hypertension_risk_forward(x2, params))
    ref2_bf16 = reference_forward(x2, params, matmul_dtype=jnp.bfloat16)
    ref2_f32 = reference_forward(x2, params)
    assert out2.shape == (batch2, 1), out2.shape
    assert jnp.allclose(out2, ref2_bf16, atol=2e-2, rtol=2e-2), \
        "bf16 mismatch vs bf16-matched ref"
    # TODO(synk): bf16 weights/activations diverge slightly from the pure-f32
    # PyTorch module; pass weight_dtype=jnp.float32 if bit-tightness matters.
    assert jnp.allclose(out2, ref2_f32, atol=5e-2, rtol=5e-2), \
        "bf16 mismatch vs f32 ref"

    print("KERNEL_OK")
</pallas_src>

<mosaic_0001>
module attributes {stable_mosaic.version = 11 : i64} {
  func.func @_mlp_kernel(%arg0: i32, %arg1: memref<8x32xf32, #tpu.memory_space<vmem>>, %arg2: memref<928x256xf32, #tpu.memory_space<vmem>>, %arg3: memref<1x1024xf32, #tpu.memory_space<vmem>>, %arg4: memref<8x1xf32, #tpu.memory_space<vmem>>) attributes {dimension_semantics = [#tpu.dimension_semantics<parallel>], iteration_bounds = array<i64: 1>, scalar_prefetch = 0 : i64, scratch_operands = 0 : i64, tpu.core_type = #tpu.core_type<tc>, window_params = [{transform_indices = @transform_0, window_bounds = array<i64: 8, 32>}, {pipeline_mode = #tpu.pipeline_mode<synchronous>, transform_indices = @transform_1, window_bounds = array<i64: 928, 256>}, {pipeline_mode = #tpu.pipeline_mode<synchronous>, transform_indices = @transform_2, window_bounds = array<i64: 1, 1024>}, {transform_indices = @transform_3, window_bounds = array<i64: 8, 1>}]} {
    %c0 = arith.constant 0 : index
    %c0_0 = arith.constant 0 : index
    %0 = vector.load %arg1[%c0, %c0_0] : memref<8x32xf32, #tpu.memory_space<vmem>>, vector<8x32xf32>
    %c0_1 = arith.constant 0 : index
    %c0_2 = arith.constant 0 : index
    %1 = vector.load %arg2[%c0_1, %c0_2] : memref<928x256xf32, #tpu.memory_space<vmem>>, vector<32x256xf32>
    %c0_3 = arith.constant 0 : index
    %c0_4 = arith.constant 0 : index
    %2 = vector.load %arg3[%c0_3, %c0_4] : memref<1x1024xf32, #tpu.memory_space<vmem>>, vector<1x256xf32>
    %cst = arith.constant dense<0.000000e+00> : vector<8x256xf32>
    %3 = tpu.matmul %0, %1, %cst {dimension_numbers = #tpu.dot_dimension_numbers<[1], [0], [0], [1], [0, 0, 1, 1], [], []>} : vector<8x32xf32>, vector<32x256xf32>, vector<8x256xf32> -> vector<8x256xf32>
    %4 = vector.broadcast %2 : vector<1x256xf32> to vector<8x256xf32>
    %5 = arith.addf %3, %4 : vector<8x256xf32>
    %cst_5 = arith.constant 5.000000e-01 : f32
    %6 = vector.broadcast %cst_5 : f32 to vector<8x256xf32>
    %7 = arith.mulf %6, %5 : vector<8x256xf32>
    %8 = math.tanh %7 : vector<8x256xf32>
    %cst_6 = arith.constant 1.000000e+00 : f32
    %9 = vector.broadcast %cst_6 : f32 to vector<8x256xf32>
    %10 = arith.addf %8, %9 : vector<8x256xf32>
    %cst_7 = arith.constant 5.000000e-01 : f32
    %11 = vector.broadcast %cst_7 : f32 to vector<8x256xf32>
    %12 = arith.mulf %11, %10 : vector<8x256xf32>
    %13 = arith.mulf %5, %12 : vector<8x256xf32>
    %c32 = arith.constant 32 : index
    %c0_8 = arith.constant 0 : index
    %14 = vector.load %arg2[%c32, %c0_8] : memref<928x256xf32, #tpu.memory_space<vmem>>, vector<256x128xf32>
    %c0_9 = arith.constant 0 : index
    %c256 = arith.constant 256 : index
    %15 = vector.load %arg3[%c0_9, %c256] : memref<1x1024xf32, #tpu.memory_space<vmem>>, vector<1x128xf32>
    %cst_10 = arith.constant dense<0.000000e+00> : vector<8x128xf32>
    %16 = tpu.matmul %13, %14, %cst_10 {dimension_numbers = #tpu.dot_dimension_numbers<[1], [0], [0], [1], [0, 0, 1, 1], [], []>} : vector<8x256xf32>, vector<256x128xf32>, vector<8x128xf32> -> vector<8x128xf32>
    %17 = vector.broadcast %15 : vector<1x128xf32> to vector<8x128xf32>
    %18 = arith.addf %16, %17 : vector<8x128xf32>
    %cst_11 = arith.constant 0.000000e+00 : f32
    %19 = vector.broadcast %cst_11 : f32 to vector<8x128xf32>
    %20 = arith.maximumf %18, %19 : vector<8x128xf32>
    %c288 = arith.constant 288 : index
    %c0_12 = arith.constant 0 : index
    %21 = vector.load %arg2[%c288, %c0_12] : memref<928x256xf32, #tpu.memory_space<vmem>>, vector<128x128xf32>
    %c0_13 = arith.constant 0 : index
    %c384 = arith.constant 384 : index
    %22 = vector.load %arg3[%c0_13, %c384] : memref<1x1024xf32, #tpu.memory_space<vmem>>, vector<1x128xf32>
    %cst_14 = arith.constant dense<0.000000e+00> : vector<8x128xf32>
    %23 = tpu.matmul %20, %21, %cst_14 {dimension_numbers = #tpu.dot_dimension_numbers<[1], [0], [0], [1], [0, 0, 1, 1], [], []>} : vector<8x128xf32>, vector<128x128xf32>, vector<8x128xf32> -> vector<8x128xf32>
    %24 = vector.broadcast %22 : vector<1x128xf32> to vector<8x128xf32>
    %25 = arith.addf %23, %24 : vector<8x128xf32>
    %cst_15 = arith.constant 5.000000e-01 : f32
    %26 = vector.broadcast %cst_15 : f32 to vector<8x128xf32>
    %27 = arith.mulf %26, %25 : vector<8x128xf32>
    %28 = math.tanh %27 : vector<8x128xf32>
    %cst_16 = arith.constant 1.000000e+00 : f32
    %29 = vector.broadcast %cst_16 : f32 to vector<8x128xf32>
    %30 = arith.addf %28, %29 : vector<8x128xf32>
    %cst_17 = arith.constant 5.000000e-01 : f32
    %31 = vector.broadcast %cst_17 : f32 to vector<8x128xf32>
    %32 = arith.mulf %31, %30 : vector<8x128xf32>
    %33 = arith.mulf %25, %32 : vector<8x128xf32>
    %c416 = arith.constant 416 : index
    %c0_18 = arith.constant 0 : index
    %34 = vector.load %arg2[%c416, %c0_18] : memref<928x256xf32, #tpu.memory_space<vmem>>, vector<128x128xf32>
    %c0_19 = arith.constant 0 : index
    %c512 = arith.constant 512 : index
    %35 = vector.load %arg3[%c0_19, %c512] : memref<1x1024xf32, #tpu.memory_space<vmem>>, vector<1x128xf32>
    %cst_20 = arith.constant dense<0.000000e+00> : vector<8x128xf32>
    %36 = tpu.matmul %33, %34, %cst_20 {dimension_numbers = #tpu.dot_dimension_numbers<[1], [0], [0], [1], [0, 0, 1, 1], [], []>} : vector<8x128xf32>, vector<128x128xf32>, vector<8x128xf32> -> vector<8x128xf32>
    %37 = vector.broadcast %35 : vector<1x128xf32> to vector<8x128xf32>
    %38 = arith.addf %36, %37 : vector<8x128xf32>
    %cst_21 = arith.constant 0.000000e+00 : f32
    %39 = vector.broadcast %cst_21 : f32 to vector<8x128xf32>
    %40 = arith.maximumf %38, %39 : vector<8x128xf32>
    %c544 = arith.constant 544 : index
    %c0_22 = arith.constant 0 : index
    %41 = vector.load %arg2[%c544, %c0_22] : memref<928x256xf32, #tpu.memory_space<vmem>>, vector<128x128xf32>
    %c0_23 = arith.constant 0 : index
    %c640 = arith.constant 640 : index
    %42 = vector.load %arg3[%c0_23, %c640] : memref<1x1024xf32, #tpu.memory_space<vmem>>, vector<1x128xf32>
    %cst_24 = arith.constant dense<0.000000e+00> : vector<8x128xf32>
    %43 = tpu.matmul %40, %41, %cst_24 {dimension_numbers = #tpu.dot_dimension_numbers<[1], [0], [0], [1], [0, 0, 1, 1], [], []>} : vector<8x128xf32>, vector<128x128xf32>, vector<8x128xf32> -> vector<8x128xf32>
    %44 = vector.broadcast %42 : vector<1x128xf32> to vector<8x128xf32>
    %45 = arith.addf %43, %44 : vector<8x128xf32>
    %cst_25 = arith.constant 5.000000e-01 : f32
    %46 = vector.broadcast %cst_25 : f32 to vector<8x128xf32>
    %47 = arith.mulf %46, %45 : vector<8x128xf32>
    %48 = math.tanh %47 : vector<8x128xf32>
    %cst_26 = arith.constant 1.000000e+00 : f32
    %49 = vector.broadcast %cst_26 : f32 to vector<8x128xf32>
    %50 = arith.addf %48, %49 : vector<8x128xf32>
    %cst_27 = arith.constant 5.000000e-01 : f32
    %51 = vector.broadcast %cst_27 : f32 to vector<8x128xf32>
    %52 = arith.mulf %51, %50 : vector<8x128xf32>
    %53 = arith.mulf %45, %52 : vector<8x128xf32>
    %c672 = arith.constant 672 : index
    %c0_28 = arith.constant 0 : index
    %54 = vector.load %arg2[%c672, %c0_28] : memref<928x256xf32, #tpu.memory_space<vmem>>, vector<128x128xf32>
    %c0_29 = arith.constant 0 : index
    %c768 = arith.constant 768 : index
    %55 = vector.load %arg3[%c0_29, %c768] : memref<1x1024xf32, #tpu.memory_space<vmem>>, vector<1x128xf32>
    %cst_30 = arith.constant dense<0.000000e+00> : vector<8x128xf32>
    %56 = tpu.matmul %53, %54, %cst_30 {dimension_numbers = #tpu.dot_dimension_numbers<[1], [0], [0], [1], [0, 0, 1, 1], [], []>} : vector<8x128xf32>, vector<128x128xf32>, vector<8x128xf32> -> vector<8x128xf32>
    %57 = vector.broadcast %55 : vector<1x128xf32> to vector<8x128xf32>
    %58 = arith.addf %56, %57 : vector<8x128xf32>
    %cst_31 = arith.constant 5.000000e-01 : f32
    %59 = vector.broadcast %cst_31 : f32 to vector<8x128xf32>
    %60 = arith.mulf %59, %58 : vector<8x128xf32>
    %61 = math.tanh %60 : vector<8x128xf32>
    %cst_32 = arith.constant 1.000000e+00 : f32
    %62 = vector.broadcast %cst_32 : f32 to vector<8x128xf32>
    %63 = arith.addf %61, %62 : vector<8x128xf32>
    %cst_33 = arith.constant 5.000000e-01 : f32
    %64 = vector.broadcast %cst_33 : f32 to vector<8x128xf32>
    %65 = arith.mulf %64, %63 : vector<8x128xf32>
    %66 = arith.mulf %58, %65 : vector<8x128xf32>
    %c800 = arith.constant 800 : index
    %c0_34 = arith.constant 0 : index
    %67 = vector.load %arg2[%c800, %c0_34] : memref<928x256xf32, #tpu.memory_space<vmem>>, vector<128x128xf32>
    %c0_35 = arith.constant 0 : index
    %c896 = arith.constant 896 : index
    %68 = vector.load %arg3[%c0_35, %c896] : memref<1x1024xf32, #tpu.memory_space<vmem>>, vector<1x128xf32>
    %cst_36 = arith.constant dense<0.000000e+00> : vector<8x128xf32>
    %69 = tpu.matmul %66, %67, %cst_36 {dimension_numbers = #tpu.dot_dimension_numbers<[1], [0], [0], [1], [0, 0, 1, 1], [], []>} : vector<8x128xf32>, vector<128x128xf32>, vector<8x128xf32> -> vector<8x128xf32>
    %70 = vector.broadcast %68 : vector<1x128xf32> to vector<8x128xf32>
    %71 = arith.addf %69, %70 : vector<8x128xf32>
    %cst_37 = arith.constant 5.000000e-01 : f32
    %72 = vector.broadcast %cst_37 : f32 to vector<8x128xf32>
    %73 = arith.mulf %72, %71 : vector<8x128xf32>
    %74 = math.tanh %73 : vector<8x128xf32>
    %cst_38 = arith.constant 1.000000e+00 : f32
    %75 = vector.broadcast %cst_38 : f32 to vector<8x128xf32>
    %76 = arith.addf %74, %75 : vector<8x128xf32>
    %cst_39 = arith.constant 5.000000e-01 : f32
    %77 = vector.broadcast %cst_39 : f32 to vector<8x128xf32>
    %78 = arith.mulf %77, %76 : vector<8x128xf32>
    %79 = vector.extract_strided_slice %78 {offsets = [0, 0], sizes = [8, 1], strides = [1, 1]} : vector<8x128xf32> to vector<8x1xf32>
    %c0_40 = arith.constant 0 : index
    %c0_41 = arith.constant 0 : index
    %80 = vector.load %arg4[%c0_40, %c0_41] : memref<8x1xf32, #tpu.memory_space<vmem>>, vector<8x1xf32>
    tpu.vector_store %arg4[%c0_40, %c0_41], %79 {strides = array<i32>} : memref<8x1xf32, #tpu.memory_space<vmem>>, vector<8x1xf32>,
    return
  }
  func.func @transform_0(%arg0: i32) -> (i32, i32) {
    %c0_i32 = arith.constant 0 : i32
    %c0_i32_0 = arith.constant 0 : i32
    return %arg0, %c0_i32 : i32, i32
  }
  func.func @transform_1(%arg0: i32) -> (i32, i32) {
    %c0_i32 = arith.constant 0 : i32
    %c0_i32_0 = arith.constant 0 : i32
    %c0_i32_1 = arith.constant 0 : i32
    return %c0_i32, %c0_i32_0 : i32, i32
  }
  func.func @transform_2(%arg0: i32) -> (i32, i32) {
    %c0_i32 = arith.constant 0 : i32
    %c0_i32_0 = arith.constant 0 : i32
    %c0_i32_1 = arith.constant 0 : i32
    return %c0_i32, %c0_i32_0 : i32, i32
  }
  func.func @transform_3(%arg0: i32) -> (i32, i32) {
    %c0_i32 = arith.constant 0 : i32
    %c0_i32_0 = arith.constant 0 : i32
    return %arg0, %c0_i32 : i32, i32
  }
}

</mosaic_0001>

<llo_original>
// kernel: tpu_custom_call.1
$region0: #{tpu_custom_call.1}
  #allocation0 [shape = 'u32[]', space=smem, size = 0x4, offset = 0x4, fixed_abs, tag = 'smem constant byte address 0x4 - core index']
  #allocation1 [shape = 'u32[144,128]{1,0:T(1,128)}', space=vmem, size = 0x12000, scoped, tag = 'internal scratch']
  %s0 = inlined_call_operand.hbm [shape: f32[8,32], index: 0, kind: input, shape index: {}]
  %s1 = inlined_call_operand.hbm [shape: f32[928,256], index: 1, kind: input, shape index: {}]
  %s2 = inlined_call_operand.hbm [shape: f32[1,1024], index: 2, kind: input, shape index: {}]
  %s3 = inlined_call_operand.vmem [shape: f32[8,1], index: 3, kind: output, shape index: {}]
  %s4 = sld [smem:[#allocation0]]
  $region34: #{tpu_custom_call.1} parent=0
    _
  %s6 = ssub.s32 1, %s4
  %s7 = scalar_select 0, %s6, %s4
  $region1: #{tpu_custom_call.1} parent=0
    #allocation2 [shape = 'u8[4096]{0}', space=vmem, size = 0x1000, scoped, tag = 'input window, operand 0, single buffered']
    #allocation3 [shape = 's32[1]{0}', space=sflag, size = 0x4, scoped, tag = 'scoped memory for tpu_custom_call.1']
    #allocation4 [shape = 'u8[950272]{0}', space=vmem, size = 0xe8000, scoped, tag = 'input window, operand 1, single buffered']
    #allocation5 [shape = 's32[1]{0}', space=sflag, size = 0x4, scoped, tag = 'scoped memory for tpu_custom_call.1']
    #allocation6 [shape = 'u8[4096]{0}', space=vmem, size = 0x1000, scoped, tag = 'input window, operand 2, single buffered']
    %8 = vsyncpa [#allocation3], 0
    %9 = vsyncpa [#allocation5], 0
    // Predicated region
    $region2: #{tpu_custom_call.1} parent=1 // pred_check
      _
    $region3: #{tpu_custom_call.1} parent=1 // pred_check_branch
      %11 = sbr.rel (0) target = $region5
    $region4: #{tpu_custom_call.1} parent=1 // pred_region
      %s13 = ssub.s32 128, 128
      %14 = vsyncadd [#allocation3], %s13
      %s16 = sshll.u32 [#allocation2], 4
      %s17 = int_to_ptr.vmem [resolvable:$true] %s16
      %19 = dma.hbm_to_vmem [thread:$0]  %s0, 128, %s17, [#allocation3]
    $region5: #{tpu_custom_call.1} parent=1 // pred_fallthru
      _
    // Predicated region
    $region6: #{tpu_custom_call.1} parent=1 // pred_check
      _
    $region7: #{tpu_custom_call.1} parent=1 // pred_check_branch
      %21 = sbr.rel (0) target = $region9
    $region8: #{tpu_custom_call.1} parent=1 // pred_region
      %s23 = ssub.s32 29696, 29696
      %24 = vsyncadd [#allocation5], %s23
      %s25 = sshll.u32 [#allocation4], 4
      %s26 = int_to_ptr.vmem [resolvable:$true] %s25
      %31 = dma.hbm_to_vmem [thread:$0]  %s1, 29696, %s26, [#allocation5], 256, 256, 16
    $region9: #{tpu_custom_call.1} parent=1 // pred_fallthru
      _
    // Predicated region
    $region10: #{tpu_custom_call.1} parent=1 // pred_check
      _
    $region11: #{tpu_custom_call.1} parent=1 // pred_check_branch
      %33 = sbr.rel (0) target = $region13
    $region12: #{tpu_custom_call.1} parent=1 // pred_region
      %s35 = ssub.s32 128, 128
      %36 = vsyncadd [#allocation5], %s35
      %s38 = sshll.u32 [#allocation6], 4
      %s39 = int_to_ptr.vmem [resolvable:$true] %s38
      %41 = dma.hbm_to_vmem [thread:$0]  %s2, 128, %s39, [#allocation5]
    $region13: #{tpu_custom_call.1} parent=1 // pred_fallthru
      _
    // Predicated region
    $region14: #{tpu_custom_call.1} parent=1 // pred_check
      _
    $region15: #{tpu_custom_call.1} parent=1 // pred_check_branch
      %43 = sbr.rel (0) target = $region17
    $region16: #{tpu_custom_call.1} parent=1 // pred_region
      %44 = dma.done [#allocation3], 128
    $region17: #{tpu_custom_call.1} parent=1 // pred_fallthru
      _
    // Predicated region
    $region18: #{tpu_custom_call.1} parent=1 // pred_check
      _
    $region19: #{tpu_custom_call.1} parent=1 // pred_check_branch
      %46 = sbr.rel (0) target = $region21
    $region20: #{tpu_custom_call.1} parent=1 // pred_region
      %47 = dma.done [#allocation5], 29696
    $region21: #{tpu_custom_call.1} parent=1 // pred_fallthru
      _
    // Predicated region
    $region22: #{tpu_custom_call.1} parent=1 // pred_check
      _
    $region23: #{tpu_custom_call.1} parent=1 // pred_check_branch
      %49 = sbr.rel (0) target = $region25
    $region24: #{tpu_custom_call.1} parent=1 // pred_region
      %50 = dma.done [#allocation5], 128
    $region25: #{tpu_custom_call.1} parent=1 // pred_fallthru
      _
    %v51 = vld [vmem:[#allocation2] sm:$0xff]
    %v52 = vld [vmem:[#allocation4] sm:$0xff]
    %v53 = vld [vmem:[#allocation4 + $0x8] sm:$0xff]
    %v54 = vld [vmem:[#allocation4 + $0x10] sm:$0xff]
    %v55 = vld [vmem:[#allocation4 + $0x18] sm:$0xff]
    %v56 = vld [vmem:[#allocation4 + $0x20] sm:$0xff]
    %v57 = vld [vmem:[#allocation4 + $0x28] sm:$0xff]
    %v58 = vld [vmem:[#allocation4 + $0x30] sm:$0xff]
    %v59 = vld [vmem:[#allocation4 + $0x38] sm:$0xff]
    %v60 = vld [vmem:[#allocation6] sm:$0x3]
    %v62 = vlaneseq
    %v63 = vshrl.u32 %v62, 7
    %v64 = vsub.s32 0, %v63
    %v65 = vrot.slane %v60, %v64
    %v66 = vlaneseq
    %v67 = vshrl.u32 %v66, 7
    %v68 = vsub.s32 1, %v67
    %v69 = vrot.slane %v60, %v68
    %vm72 = vcmask 261120
    %v74 = vsel %vm72, %v51, 0
    %76 = vmatprep.subr.mxu0 %v53
    %77 = vmatpush1.msra.mxu0 %v52
    %78 = vmatprep.subr.mxu0 %v55
    %79 = vmatpush1.msra.mxu0 %v54
    %80 = vmatprep.subr.mxu0 %v57
    %81 = vmatpush1.msra.mxu0 %v56
    %82 = vmatprep.subr.mxu0 %v59
    %83 = vmatpush1.msra.mxu0 %v58
    %84 = vmatprep.subr.mxu0 0.0
    %85 = vmatpush1.msra.mxu0 0.0
    %86 = vmatprep.subr.mxu0 0.0
    %87 = vmatpush1.msra.mxu0 0.0
    %88 = vmatprep.subr.mxu0 0.0
    %89 = vmatpush1.msra.mxu0 0.0
    %90 = vmatprep.subr.mxu0 0.0
    %91 = vmatpush1.msra.mxu0 0.0
    %92 = vmatprep.subr.mxu0 0.0
    %93 = vmatpush1.msra.mxu0 0.0
    %94 = vmatprep.subr.mxu0 0.0
    %95 = vmatpush1.msra.mxu0 0.0
    %96 = vmatprep.subr.mxu0 0.0
    %97 = vmatpush1.msra.mxu0 0.0
    %98 = vmatprep.subr.mxu0 0.0
    %99 = vmatpush1.msra.mxu0 0.0
    %100 = vmatprep.subr.mxu0 0.0
    %101 = vmatpush1.msra.mxu0 0.0
    %102 = vmatprep.subr.mxu0 0.0
    %103 = vmatpush1.msra.mxu0 0.0
    %104 = vmatprep.subr.mxu0 0.0
    %105 = vmatpush1.msra.mxu0 0.0
    %106 = vmatprep.subr.mxu0 0.0
    %107 = vmatpush1.msra.mxu0 0.0
    %108 = vmatprep.subr.mxu0 0.0
    %109 = vmatpush1.msra.mxu0 0.0
    %110 = vmatprep.subr.mxu0 0.0
    %111 = vmatpush1.msra.mxu0 0.0
    %112 = vmatprep.subr.mxu0 0.0
    %113 = vmatpush1.msra.mxu0 0.0
    %114 = vmatprep.subr.mxu0 0.0
    %115 = vmatpush1.msra.mxu0 0.0
    %116 = vmatprep.subr.mxu0 0.0
    %117 = vmatpush1.msra.mxu0 0.0
    %118 = vmatprep.subr.mxu0 0.0
    %119 = vmatpush1.msra.mxu0 0.0
    %120 = vmatprep.subr.mxu0 0.0
    %121 = vmatpush1.msra.mxu0 0.0
    %122 = vmatprep.subr.mxu0 0.0
    %123 = vmatpush1.msra.mxu0 0.0
    %124 = vmatprep.subr.mxu0 0.0
    %125 = vmatpush1.msra.mxu0 0.0
    %126 = vmatprep.subr.mxu0 0.0
    %127 = vmatpush1.msra.mxu0 0.0
    %128 = vmatprep.subr.mxu0 0.0
    %129 = vmatpush1.msra.mxu0 0.0
    %130 = vmatprep.subr.mxu0 0.0
    %131 = vmatpush1.msra.mxu0 0.0
    %132 = vmatprep.subr.mxu0 0.0
    %133 = vmatpush1.msra.mxu0 0.0
    %134 = vmatprep.subr.mxu0 0.0
    %135 = vmatpush1.msra.mxu0 0.0
    %136 = vmatprep.subr.mxu0 0.0
    %137 = vmatpush1.msra.mxu0 0.0
    %138 = vmatprep.subr.mxu0 0.0
    %139 = vmatpush1.msra.mxu0 0.0
    %140 = vmatprep.mubr.f32.mxu0 0.0
    %141 = vmatmul.mubr.f32.gmra.mrb[0].mxu0 %v74
    %v142 = vpop.f32.mrb[0].mxu0
    %v143 = vadd.f32 %v65, %v142
    %v144 = vpop.f32.mrb[0].mxu0
    %v145 = vadd.f32 %v69, %v144
    %146 = vdwg.mxu0
    %v147 = vmul.f32 %v143, 0.5
    %v148 = vmul.f32 %v145, 0.5
    %v149 = vtanh.pop %v147
    %v150 = vtanh.pop %v148
    %v151 = vadd.f32 %v149, 1.0
    %v152 = vadd.f32 %v150, 1.0
    %v153 = vmul.f32 %v151, 0.5
    %v154 = vmul.f32 %v152, 0.5
    %v155 = vmul.f32 %v143, %v153
    %v156 = vmul.f32 %v145, %v154
    %v157 = vld [vmem:[#allocation4 + $0x40] sm:$0xff]
    %v158 = vld [vmem:[#allocation4 + $0x50] sm:$0xff]
    %v159 = vld [vmem:[#allocation4 + $0x60] sm:$0xff]
    %v160 = vld [vmem:[#allocation4 + $0x70] sm:$0xff]
    %v161 = vld [vmem:[#allocation4 + $0x80] sm:$0xff]
    %v162 = vld [vmem:[#allocation4 + $0x90] sm:$0xff]
    %v163 = vld [vmem:[#allocation4 + $0xa0] sm:$0xff]
    %v164 = vld [vmem:[#allocation4 + $0xb0] sm:$0xff]
    %v165 = vld [vmem:[#allocation4 + $0xc0] sm:$0xff]
    %v166 = vld [vmem:[#allocation4 + $0xd0] sm:$0xff]
    %v167 = vld [vmem:[#allocation4 + $0xe0] sm:$0xff]
    %v168 = vld [vmem:[#allocation4 + $0xf0] sm:$0xff]
    %v169 = vld [vmem:[#allocation4 + $0x100] sm:$0xff]
    %v170 = vld [vmem:[#allocation4 + $0x110] sm:$0xff]
    %v171 = vld [vmem:[#allocation4 + $0x120] sm:$0xff]
    %v172 = vld [vmem:[#allocation4 + $0x130] sm:$0xff]
    %v173 = vld [vmem:[#allocation4 + $0x140] sm:$0xff]
    %v174 = vld [vmem:[#allocation4 + $0x150] sm:$0xff]
    %v175 = vld [vmem:[#allocation4 + $0x160] sm:$0xff]
    %v176 = vld [vmem:[#allocation4 + $0x170] sm:$0xff]
    %v177 = vld [vmem:[#allocation4 + $0x180] sm:$0xff]
    %v178 = vld [vmem:[#allocation4 + $0x190] sm:$0xff]
    %v179 = vld [vmem:[#allocation4 + $0x1a0] sm:$0xff]
    %v180 = vld [vmem:[#allocation4 + $0x1b0] sm:$0xff]
    %v181 = vld [vmem:[#allocation4 + $0x1c0] sm:$0xff]
    %v182 = vld [vmem:[#allocation4 + $0x1d0] sm:$0xff]
    %v183 = vld [vmem:[#allocation4 + $0x1e0] sm:$0xff]
    %v184 = vld [vmem:[#allocation4 + $0x1f0] sm:$0xff]
    %v185 = vld [vmem:[#allocation4 + $0x200] sm:$0xff]
    %v186 = vld [vmem:[#allocation4 + $0x210] sm:$0xff]
    %v187 = vld [vmem:[#allocation4 + $0x220] sm:$0xff]
    %v188 = vld [vmem:[#allocation4 + $0x230] sm:$0xff]
    %v189 = vld [vmem:[#allocation6 + $0x2] sm:$0x1]
    %v191 = vlaneseq
    %v192 = vshrl.u32 %v191, 7
    %v193 = vsub.s32 0, %v192
    %v194 = vrot.slane %v189, %v193
    %196 = vmatprep.subr.mxu0 0.0
    %197 = vmatpush1.msra.mxu0 %v157
    %198 = vmatprep.subr.mxu0 0.0
    %199 = vmatpush1.msra.mxu0 %v158
    %200 = vmatprep.subr.mxu0 0.0
    %201 = vmatpush1.msra.mxu0 %v159
    %202 = vmatprep.subr.mxu0 0.0
    %203 = vmatpush1.msra.mxu0 %v160
    %204 = vmatprep.subr.mxu0 0.0
    %205 = vmatpush1.msra.mxu0 %v161
    %206 = vmatprep.subr.mxu0 0.0
    %207 = vmatpush1.msra.mxu0 %v162
    %208 = vmatprep.subr.mxu0 0.0
    %209 = vmatpush1.msra.mxu0 %v163
    %210 = vmatprep.subr.mxu0 0.0
    %211 = vmatpush1.msra.mxu0 %v164
    %212 = vmatprep.subr.mxu0 0.0
    %213 = vmatpush1.msra.mxu0 %v165
    %214 = vmatprep.subr.mxu0 0.0
    %215 = vmatpush1.msra.mxu0 %v166
    %216 = vmatprep.subr.mxu0 0.0
    %217 = vmatpush1.msra.mxu0 %v167
    %218 = vmatprep.subr.mxu0 0.0
    %219 = vmatpush1.msra.mxu0 %v168
    %220 = vmatprep.subr.mxu0 0.0
    %221 = vmatpush1.msra.mxu0 %v169
    %222 = vmatprep.subr.mxu0 0.0
    %223 = vmatpush1.msra.mxu0 %v170
    %224 = vmatprep.subr.mxu0 0.0
    %225 = vmatpush1.msra.mxu0 %v171
    %226 = vmatprep.subr.mxu0 0.0
    %227 = vmatpush1.msra.mxu0 %v172
    %228 = vmatprep.subr.mxu0 0.0
    %229 = vmatpush1.msra.mxu0 %v173
    %230 = vmatprep.subr.mxu0 0.0
    %231 = vmatpush1.msra.mxu0 %v174
    %232 = vmatprep.subr.mxu0 0.0
    %233 = vmatpush1.msra.mxu0 %v175
    %234 = vmatprep.subr.mxu0 0.0
    %235 = vmatpush1.msra.mxu0 %v176
    %236 = vmatprep.subr.mxu0 0.0
    %237 = vmatpush1.msra.mxu0 %v177
    %238 = vmatprep.subr.mxu0 0.0
    %239 = vmatpush1.msra.mxu0 %v178
    %240 = vmatprep.subr.mxu0 0.0
    %241 = vmatpush1.msra.mxu0 %v179
    %242 = vmatprep.subr.mxu0 0.0
    %243 = vmatpush1.msra.mxu0 %v180
    %244 = vmatprep.subr.mxu0 0.0
    %245 = vmatpush1.msra.mxu0 %v181
    %246 = vmatprep.subr.mxu0 0.0
    %247 = vmatpush1.msra.mxu0 %v182
    %248 = vmatprep.subr.mxu0 0.0
    %249 = vmatpush1.msra.mxu0 %v183
    %250 = vmatprep.subr.mxu0 0.0
    %251 = vmatpush1.msra.mxu0 %v184
    %252 = vmatprep.subr.mxu0 0.0
    %253 = vmatpush1.msra.mxu0 %v185
    %254 = vmatprep.subr.mxu0 0.0
    %255 = vmatpush1.msra.mxu0 %v186
    %256 = vmatprep.subr.mxu0 0.0
    %257 = vmatpush1.msra.mxu0 %v187
    %258 = vmatprep.subr.mxu0 0.0
    %259 = vmatpush1.msra.mxu0 %v188
    %260 = vmatprep.mubr.f32.mxu0 %v156
    %261 = vmatmul.mubr.f32.gmra.mrb[0].mxu0 %v155
    %v262 = vpop.f32.mrb[0].mxu0
    %v263 = vadd.f32 %v194, %v262
    %v264 = vpop.f32.mrb[0].mxu0
    %265 = vdwg.mxu0
    %v266 = vmax.f32 %v263, 0.0
    %v267 = vld [vmem:[#allocation4 + $0x240] sm:$0xff]
    %v268 = vld [vmem:[#allocation4 + $0x250] sm:$0xff]
    %v269 = vld [vmem:[#allocation4 + $0x260] sm:$0xff]
    %v270 = vld [vmem:[#allocation4 + $0x270] sm:$0xff]
    %v271 = vld [vmem:[#allocation4 + $0x280] sm:$0xff]
    %v272 = vld [vmem:[#allocation4 + $0x290] sm:$0xff]
    %v273 = vld [vmem:[#allocation4 + $0x2a0] sm:$0xff]
    %v274 = vld [vmem:[#allocation4 + $0x2b0] sm:$0xff]
    %v275 = vld [vmem:[#allocation4 + $0x2c0] sm:$0xff]
    %v276 = vld [vmem:[#allocation4 + $0x2d0] sm:$0xff]
    %v277 = vld [vmem:[#allocation4 + $0x2e0] sm:$0xff]
    %v278 = vld [vmem:[#allocation4 + $0x2f0] sm:$0xff]
    %v279 = vld [vmem:[#allocation4 + $0x300] sm:$0xff]
    %v280 = vld [vmem:[#allocation4 + $0x310] sm:$0xff]
    %v281 = vld [vmem:[#allocation4 + $0x320] sm:$0xff]
    %v282 = vld [vmem:[#allocation4 + $0x330] sm:$0xff]
    %v283 = vld [vmem:[#allocation6 + $0x3] sm:$0x1]
    %v285 = vlaneseq
    %v286 = vshrl.u32 %v285, 7
    %v287 = vsub.s32 0, %v286
    %v288 = vrot.slane %v283, %v287
    %290 = vmatprep.subr.mxu0 0.0
    %291 = vmatpush1.msra.mxu0 %v267
    %292 = vmatprep.subr.mxu0 0.0
    %293 = vmatpush1.msra.mxu0 %v268
    %294 = vmatprep.subr.mxu0 0.0
    %295 = vmatpush1.msra.mxu0 %v269
    %296 = vmatprep.subr.mxu0 0.0
    %297 = vmatpush1.msra.mxu0 %v270
    %298 = vmatprep.subr.mxu0 0.0
    %299 = vmatpush1.msra.mxu0 %v271
    %300 = vmatprep.subr.mxu0 0.0
    %301 = vmatpush1.msra.mxu0 %v272
    %302 = vmatprep.subr.mxu0 0.0
    %303 = vmatpush1.msra.mxu0 %v273
    %304 = vmatprep.subr.mxu0 0.0
    %305 = vmatpush1.msra.mxu0 %v274
    %306 = vmatprep.subr.mxu0 0.0
    %307 = vmatpush1.msra.mxu0 %v275
    %308 = vmatprep.subr.mxu0 0.0
    %309 = vmatpush1.msra.mxu0 %v276
    %310 = vmatprep.subr.mxu0 0.0
    %311 = vmatpush1.msra.mxu0 %v277
    %312 = vmatprep.subr.mxu0 0.0
    %313 = vmatpush1.msra.mxu0 %v278
    %314 = vmatprep.subr.mxu0 0.0
    %315 = vmatpush1.msra.mxu0 %v279
    %316 = vmatprep.subr.mxu0 0.0
    %317 = vmatpush1.msra.mxu0 %v280
    %318 = vmatprep.subr.mxu0 0.0
    %319 = vmatpush1.msra.mxu0 %v281
    %320 = vmatprep.subr.mxu0 0.0
    %321 = vmatpush1.msra.mxu0 %v282
    %322 = vmatprep.subr.mxu0 0.0
    %323 = vmatpush1.msra.mxu0 0.0
    %324 = vmatprep.subr.mxu0 0.0
    %325 = vmatpush1.msra.mxu0 0.0
    %326 = vmatprep.subr.mxu0 0.0
    %327 = vmatpush1.msra.mxu0 0.0
    %328 = vmatprep.subr.mxu0 0.0
    %329 = vmatpush1.msra.mxu0 0.0
    %330 = vmatprep.subr.mxu0 0.0
    %331 = vmatpush1.msra.mxu0 0.0
    %332 = vmatprep.subr.mxu0 0.0
    %333 = vmatpush1.msra.mxu0 0.0
    %334 = vmatprep.subr.mxu0 0.0
    %335 = vmatpush1.msra.mxu0 0.0
    %336 = vmatprep.subr.mxu0 0.0
    %337 = vmatpush1.msra.mxu0 0.0
    %338 = vmatprep.subr.mxu0 0.0
    %339 = vmatpush1.msra.mxu0 0.0
    %340 = vmatprep.subr.mxu0 0.0
    %341 = vmatpush1.msra.mxu0 0.0
    %342 = vmatprep.subr.mxu0 0.0
    %343 = vmatpush1.msra.mxu0 0.0
    %344 = vmatprep.subr.mxu0 0.0
    %345 = vmatpush1.msra.mxu0 0.0
    %346 = vmatprep.subr.mxu0 0.0
    %347 = vmatpush1.msra.mxu0 0.0
    %348 = vmatprep.subr.mxu0 0.0
    %349 = vmatpush1.msra.mxu0 0.0
    %350 = vmatprep.subr.mxu0 0.0
    %351 = vmatpush1.msra.mxu0 0.0
    %352 = vmatprep.subr.mxu0 0.0
    %353 = vmatpush1.msra.mxu0 0.0
    %354 = vmatprep.mubr.f32.mxu0 0.0
    %355 = vmatmul.mubr.f32.gmra.mrb[0].mxu0 %v266
    %v356 = vpop.f32.mrb[0].mxu0
    %v357 = vadd.f32 %v288, %v356
    %v358 = vpop.f32.mrb[0].mxu0
    %359 = vdwg.mxu0
    %v360 = vmul.f32 %v357, 0.5
    %v361 = vtanh.pop %v360
    %v362 = vadd.f32 %v361, 1.0
    %v363 = vmul.f32 %v362, 0.5
    %v364 = vmul.f32 %v357, %v363
    %v365 = vld [vmem:[#allocation4 + $0x340] sm:$0xff]
    %v366 = vld [vmem:[#allocation4 + $0x350] sm:$0xff]
    %v367 = vld [vmem:[#allocation4 + $0x360] sm:$0xff]
    %v368 = vld [vmem:[#allocation4 + $0x370] sm:$0xff]
    %v369 = vld [vmem:[#allocation4 + $0x380] sm:$0xff]
    %v370 = vld [vmem:[#allocation4 + $0x390] sm:$0xff]
    %v371 = vld [vmem:[#allocation4 + $0x3a0] sm:$0xff]
    %v372 = vld [vmem:[#allocation4 + $0x3b0] sm:$0xff]
    %v373 = vld [vmem:[#allocation4 + $0x3c0] sm:$0xff]
    %v374 = vld [vmem:[#allocation4 + $0x3d0] sm:$0xff]
    %v375 = vld [vmem:[#allocation4 + $0x3e0] sm:$0xff]
    %v376 = vld [vmem:[#allocation4 + $0x3f0] sm:$0xff]
    %v377 = vld [vmem:[#allocation4 + $0x400] sm:$0xff]
    %v378 = vld [vmem:[#allocation4 + $0x410] sm:$0xff]
    %v379 = vld [vmem:[#allocation4 + $0x420] sm:$0xff]
    %v380 = vld [vmem:[#allocation4 + $0x430] sm:$0xff]
    %v381 = vld [vmem:[#allocation6 + $0x4] sm:$0x1]
    %v383 = vlaneseq
    %v384 = vshrl.u32 %v383, 7
    %v385 = vsub.s32 0, %v384
    %v386 = vrot.slane %v381, %v385
    %388 = vmatprep.subr.mxu0 0.0
    %389 = vmatpush1.msra.mxu0 %v365
    %390 = vmatprep.subr.mxu0 0.0
    %391 = vmatpush1.msra.mxu0 %v366
    %392 = vmatprep.subr.mxu0 0.0
    %393 = vmatpush1.msra.mxu0 %v367
    %394 = vmatprep.subr.mxu0 0.0
    %395 = vmatpush1.msra.mxu0 %v368
    %396 = vmatprep.subr.mxu0 0.0
    %397 = vmatpush1.msra.mxu0 %v369
    %398 = vmatprep.subr.mxu0 0.0
    %399 = vmatpush1.msra.mxu0 %v370
    %400 = vmatprep.subr.mxu0 0.0
    %401 = vmatpush1.msra.mxu0 %v371
    %402 = vmatprep.subr.mxu0 0.0
    %403 = vmatpush1.msra.mxu0 %v372
    %404 = vmatprep.subr.mxu0 0.0
    %405 = vmatpush1.msra.mxu0 %v373
    %406 = vmatprep.subr.mxu0 0.0
    %407 = vmatpush1.msra.mxu0 %v374
    %408 = vmatprep.subr.mxu0 0.0
    %409 = vmatpush1.msra.mxu0 %v375
    %410 = vmatprep.subr.mxu0 0.0
    %411 = vmatpush1.msra.mxu0 %v376
    %412 = vmatprep.subr.mxu0 0.0
    %413 = vmatpush1.msra.mxu0 %v377
    %414 = vmatprep.subr.mxu0 0.0
    %415 = vmatpush1.msra.mxu0 %v378
    %416 = vmatprep.subr.mxu0 0.0
    %417 = vmatpush1.msra.mxu0 %v379
    %418 = vmatprep.subr.mxu0 0.0
    %419 = vmatpush1.msra.mxu0 %v380
    %420 = vmatprep.subr.mxu0 0.0
    %421 = vmatpush1.msra.mxu0 0.0
    %422 = vmatprep.subr.mxu0 0.0
    %423 = vmatpush1.msra.mxu0 0.0
    %424 = vmatprep.subr.mxu0 0.0
    %425 = vmatpush1.msra.mxu0 0.0
    %426 = vmatprep.subr.mxu0 0.0
    %427 = vmatpush1.msra.mxu0 0.0
    %428 = vmatprep.subr.mxu0 0.0
    %429 = vmatpush1.msra.mxu0 0.0
    %430 = vmatprep.subr.mxu0 0.0
    %431 = vmatpush1.msra.mxu0 0.0
    %432 = vmatprep.subr.mxu0 0.0
    %433 = vmatpush1.msra.mxu0 0.0
    %434 = vmatprep.subr.mxu0 0.0
    %435 = vmatpush1.msra.mxu0 0.0
    %436 = vmatprep.subr.mxu0 0.0
    %437 = vmatpush1.msra.mxu0 0.0
    %438 = vmatprep.subr.mxu0 0.0
    %439 = vmatpush1.msra.mxu0 0.0
    %440 = vmatprep.subr.mxu0 0.0
    %441 = vmatpush1.msra.mxu0 0.0
    %442 = vmatprep.subr.mxu0 0.0
    %443 = vmatpush1.msra.mxu0 0.0
    %444 = vmatprep.subr.mxu0 0.0
    %445 = vmatpush1.msra.mxu0 0.0
    %446 = vmatprep.subr.mxu0 0.0
    %447 = vmatpush1.msra.mxu0 0.0
    %448 = vmatprep.subr.mxu0 0.0
    %449 = vmatpush1.msra.mxu0 0.0
    %450 = vmatprep.subr.mxu0 0.0
    %451 = vmatpush1.msra.mxu0 0.0
    %452 = vmatprep.mubr.f32.mxu0 0.0
    %453 = vmatmul.mubr.f32.gmra.mrb[0].mxu0 %v364
    %v454 = vpop.f32.mrb[0].mxu0
    %v455 = vadd.f32 %v386, %v454
    %v456 = vpop.f32.mrb[0].mxu0
    %457 = vdwg.mxu0
    %v458 = vmax.f32 %v455, 0.0
    %v459 = vld [vmem:[#allocation4 + $0x440] sm:$0xff]
    %v460 = vld [vmem:[#allocation4 + $0x450] sm:$0xff]
    %v461 = vld [vmem:[#allocation4 + $0x460] sm:$0xff]
    %v462 = vld [vmem:[#allocation4 + $0x470] sm:$0xff]
    %v463 = vld [vmem:[#allocation4 + $0x480] sm:$0xff]
    %v464 = vld [vmem:[#allocation4 + $0x490] sm:$0xff]
    %v465 = vld [vmem:[#allocation4 + $0x4a0] sm:$0xff]
    %v466 = vld [vmem:[#allocation4 + $0x4b0] sm:$0xff]
    %v467 = vld [vmem:[#allocation4 + $0x4c0] sm:$0xff]
    %v468 = vld [vmem:[#allocation4 + $0x4d0] sm:$0xff]
    %v469 = vld [vmem:[#allocation4 + $0x4e0] sm:$0xff]
    %v470 = vld [vmem:[#allocation4 + $0x4f0] sm:$0xff]
    %v471 = vld [vmem:[#allocation4 + $0x500] sm:$0xff]
    %v472 = vld [vmem:[#allocation4 + $0x510] sm:$0xff]
    %v473 = vld [vmem:[#allocation4 + $0x520] sm:$0xff]
    %v474 = vld [vmem:[#allocation4 + $0x530] sm:$0xff]
    %v475 = vld [vmem:[#allocation6 + $0x5] sm:$0x1]
    %v477 = vlaneseq
    %v478 = vshrl.u32 %v477, 7
    %v479 = vsub.s32 0, %v478
    %v480 = vrot.slane %v475, %v479
    %482 = vmatprep.subr.mxu0 0.0
    %483 = vmatpush1.msra.mxu0 %v459
    %484 = vmatprep.subr.mxu0 0.0
    %485 = vmatpush1.msra.mxu0 %v460
    %486 = vmatprep.subr.mxu0 0.0
    %487 = vmatpush1.msra.mxu0 %v461
    %488 = vmatprep.subr.mxu0 0.0
    %489 = vmatpush1.msra.mxu0 %v462
    %490 = vmatprep.subr.mxu0 0.0
    %491 = vmatpush1.msra.mxu0 %v463
    %492 = vmatprep.subr.mxu0 0.0
    %493 = vmatpush1.msra.mxu0 %v464
    %494 = vmatprep.subr.mxu0 0.0
    %495 = vmatpush1.msra.mxu0 %v465
    %496 = vmatprep.subr.mxu0 0.0
    %497 = vmatpush1.msra.mxu0 %v466
    %498 = vmatprep.subr.mxu0 0.0
    %499 = vmatpush1.msra.mxu0 %v467
    %500 = vmatprep.subr.mxu0 0.0
    %501 = vmatpush1.msra.mxu0 %v468
    %502 = vmatprep.subr.mxu0 0.0
    %503 = vmatpush1.msra.mxu0 %v469
    %504 = vmatprep.subr.mxu0 0.0
    %505 = vmatpush1.msra.mxu0 %v470
    %506 = vmatprep.subr.mxu0 0.0
    %507 = vmatpush1.msra.mxu0 %v471
    %508 = vmatprep.subr.mxu0 0.0
    %509 = vmatpush1.msra.mxu0 %v472
    %510 = vmatprep.subr.mxu0 0.0
    %511 = vmatpush1.msra.mxu0 %v473
    %512 = vmatprep.subr.mxu0 0.0
    %513 = vmatpush1.msra.mxu0 %v474
    %514 = vmatprep.subr.mxu0 0.0
    %515 = vmatpush1.msra.mxu0 0.0
    %516 = vmatprep.subr.mxu0 0.0
    %517 = vmatpush1.msra.mxu0 0.0
    %518 = vmatprep.subr.mxu0 0.0
    %519 = vmatpush1.msra.mxu0 0.0
    %520 = vmatprep.subr.mxu0 0.0
    %521 = vmatpush1.msra.mxu0 0.0
    %522 = vmatprep.subr.mxu0 0.0
    %523 = vmatpush1.msra.mxu0 0.0
    %524 = vmatprep.subr.mxu0 0.0
    %525 = vmatpush1.msra.mxu0 0.0
    %526 = vmatprep.subr.mxu0 0.0
    %527 = vmatpush1.msra.mxu0 0.0
    %528 = vmatprep.subr.mxu0 0.0
    %529 = vmatpush1.msra.mxu0 0.0
    %530 = vmatprep.subr.mxu0 0.0
    %531 = vmatpush1.msra.mxu0 0.0
    %532 = vmatprep.subr.mxu0 0.0
    %533 = vmatpush1.msra.mxu0 0.0
    %534 = vmatprep.subr.mxu0 0.0
    %535 = vmatpush1.msra.mxu0 0.0
    %536 = vmatprep.subr.mxu0 0.0
    %537 = vmatpush1.msra.mxu0 0.0
    %538 = vmatprep.subr.mxu0 0.0
    %539 = vmatpush1.msra.mxu0 0.0
    %540 = vmatprep.subr.mxu0 0.0
    %541 = vmatpush1.msra.mxu0 0.0
    %542 = vmatprep.subr.mxu0 0.0
    %543 = vmatpush1.msra.mxu0 0.0
    %544 = vmatprep.subr.mxu0 0.0
    %545 = vmatpush1.msra.mxu0 0.0
    %546 = vmatprep.mubr.f32.mxu0 0.0
    %547 = vmatmul.mubr.f32.gmra.mrb[0].mxu0 %v458
    %v548 = vpop.f32.mrb[0].mxu0
    %v549 = vadd.f32 %v480, %v548
    %v550 = vpop.f32.mrb[0].mxu0
    %551 = vdwg.mxu0
    %v552 = vmul.f32 %v549, 0.5
    %v553 = vtanh.pop %v552
    %v554 = vadd.f32 %v553, 1.0
    %v555 = vmul.f32 %v554, 0.5
    %v556 = vmul.f32 %v549, %v555
    %v557 = vld [vmem:[#allocation4 + $0x540] sm:$0xff]
    %v558 = vld [vmem:[#allocation4 + $0x550] sm:$0xff]
    %v559 = vld [vmem:[#allocation4 + $0x560] sm:$0xff]
    %v560 = vld [vmem:[#allocation4 + $0x570] sm:$0xff]
    %v561 = vld [vmem:[#allocation4 + $0x580] sm:$0xff]
    %v562 = vld [vmem:[#allocation4 + $0x590] sm:$0xff]
    %v563 = vld [vmem:[#allocation4 + $0x5a0] sm:$0xff]
    %v564 = vld [vmem:[#allocation4 + $0x5b0] sm:$0xff]
    %v565 = vld [vmem:[#allocation4 + $0x5c0] sm:$0xff]
    %v566 = vld [vmem:[#allocation4 + $0x5d0] sm:$0xff]
    %v567 = vld [vmem:[#allocation4 + $0x5e0] sm:$0xff]
    %v568 = vld [vmem:[#allocation4 + $0x5f0] sm:$0xff]
    %v569 = vld [vmem:[#allocation4 + $0x600] sm:$0xff]
    %v570 = vld [vmem:[#allocation4 + $0x610] sm:$0xff]
    %v571 = vld [vmem:[#allocation4 + $0x620] sm:$0xff]
    %v572 = vld [vmem:[#allocation4 + $0x630] sm:$0xff]
    %v573 = vld [vmem:[#allocation6 + $0x6] sm:$0x1]
    %v575 = vlaneseq
    %v576 = vshrl.u32 %v575, 7
    %v577 = vsub.s32 0, %v576
    %v578 = vrot.slane %v573, %v577
    %580 = vmatprep.subr.mxu0 0.0
    %581 = vmatpush1.msra.mxu0 %v557
    %582 = vmatprep.subr.mxu0 0.0
    %583 = vmatpush1.msra.mxu0 %v558
    %584 = vmatprep.subr.mxu0 0.0
    %585 = vmatpush1.msra.mxu0 %v559
    %586 = vmatprep.subr.mxu0 0.0
    %587 = vmatpush1.msra.mxu0 %v560
    %588 = vmatprep.subr.mxu0 0.0
    %589 = vmatpush1.msra.mxu0 %v561
    %590 = vmatprep.subr.mxu0 0.0
    %591 = vmatpush1.msra.mxu0 %v562
    %592 = vmatprep.subr.mxu0 0.0
    %593 = vmatpush1.msra.mxu0 %v563
    %594 = vmatprep.subr.mxu0 0.0
    %595 = vmatpush1.msra.mxu0 %v564
    %596 = vmatprep.subr.mxu0 0.0
    %597 = vmatpush1.msra.mxu0 %v565
    %598 = vmatprep.subr.mxu0 0.0
    %599 = vmatpush1.msra.mxu0 %v566
    %600 = vmatprep.subr.mxu0 0.0
    %601 = vmatpush1.msra.mxu0 %v567
    %602 = vmatprep.subr.mxu0 0.0
    %603 = vmatpush1.msra.mxu0 %v568
    %604 = vmatprep.subr.mxu0 0.0
    %605 = vmatpush1.msra.mxu0 %v569
    %606 = vmatprep.subr.mxu0 0.0
    %607 = vmatpush1.msra.mxu0 %v570
    %608 = vmatprep.subr.mxu0 0.0
    %609 = vmatpush1.msra.mxu0 %v571
    %610 = vmatprep.subr.mxu0 0.0
    %611 = vmatpush1.msra.mxu0 %v572
    %612 = vmatprep.subr.mxu0 0.0
    %613 = vmatpush1.msra.mxu0 0.0
    %614 = vmatprep.subr.mxu0 0.0
    %615 = vmatpush1.msra.mxu0 0.0
    %616 = vmatprep.subr.mxu0 0.0
    %617 = vmatpush1.msra.mxu0 0.0
    %618 = vmatprep.subr.mxu0 0.0
    %619 = vmatpush1.msra.mxu0 0.0
    %620 = vmatprep.subr.mxu0 0.0
    %621 = vmatpush1.msra.mxu0 0.0
    %622 = vmatprep.subr.mxu0 0.0
    %623 = vmatpush1.msra.mxu0 0.0
    %624 = vmatprep.subr.mxu0 0.0
    %625 = vmatpush1.msra.mxu0 0.0
    %626 = vmatprep.subr.mxu0 0.0
    %627 = vmatpush1.msra.mxu0 0.0
    %628 = vmatprep.subr.mxu0 0.0
    %629 = vmatpush1.msra.mxu0 0.0
    %630 = vmatprep.subr.mxu0 0.0
    %631 = vmatpush1.msra.mxu0 0.0
    %632 = vmatprep.subr.mxu0 0.0
    %633 = vmatpush1.msra.mxu0 0.0
    %634 = vmatprep.subr.mxu0 0.0
    %635 = vmatpush1.msra.mxu0 0.0
    %636 = vmatprep.subr.mxu0 0.0
    %637 = vmatpush1.msra.mxu0 0.0
    %638 = vmatprep.subr.mxu0 0.0
    %639 = vmatpush1.msra.mxu0 0.0
    %640 = vmatprep.subr.mxu0 0.0
    %641 = vmatpush1.msra.mxu0 0.0
    %642 = vmatprep.subr.mxu0 0.0
    %643 = vmatpush1.msra.mxu0 0.0
    %644 = vmatprep.mubr.f32.mxu0 0.0
    %645 = vmatmul.mubr.f32.gmra.mrb[0].mxu0 %v556
    %v646 = vpop.f32.mrb[0].mxu0
    %v647 = vadd.f32 %v578, %v646
    %v648 = vpop.f32.mrb[0].mxu0
    %649 = vdwg.mxu0
    %v650 = vmul.f32 %v647, 0.5
    %v651 = vtanh.pop %v650
    %v652 = vadd.f32 %v651, 1.0
    %v653 = vmul.f32 %v652, 0.5
    %v654 = vmul.f32 %v647, %v653
    %v655 = vld [vmem:[#allocation4 + $0x640] sm:$0xff]
    %v656 = vld [vmem:[#allocation4 + $0x650] sm:$0xff]
    %v657 = vld [vmem:[#allocation4 + $0x660] sm:$0xff]
    %v658 = vld [vmem:[#allocation4 + $0x670] sm:$0xff]
    %v659 = vld [vmem:[#allocation4 + $0x680] sm:$0xff]
    %v660 = vld [vmem:[#allocation4 + $0x690] sm:$0xff]
    %v661 = vld [vmem:[#allocation4 + $0x6a0] sm:$0xff]
    %v662 = vld [vmem:[#allocation4 + $0x6b0] sm:$0xff]
    %v663 = vld [vmem:[#allocation4 + $0x6c0] sm:$0xff]
    %v664 = vld [vmem:[#allocation4 + $0x6d0] sm:$0xff]
    %v665 = vld [vmem:[#allocation4 + $0x6e0] sm:$0xff]
    %v666 = vld [vmem:[#allocation4 + $0x6f0] sm:$0xff]
    %v667 = vld [vmem:[#allocation4 + $0x700] sm:$0xff]
    %v668 = vld [vmem:[#allocation4 + $0x710] sm:$0xff]
    %v669 = vld [vmem:[#allocation4 + $0x720] sm:$0xff]
    %v670 = vld [vmem:[#allocation4 + $0x730] sm:$0xff]
    %v671 = vld [vmem:[#allocation6 + $0x7] sm:$0x1]
    %v673 = vlaneseq
    %v674 = vshrl.u32 %v673, 7
    %v675 = vsub.s32 0, %v674
    %v676 = vrot.slane %v671, %v675
    %678 = vmatprep.subr.mxu0 0.0
    %679 = vmatpush1.msra.mxu0 %v655
    %680 = vmatprep.subr.mxu0 0.0
    %681 = vmatpush1.msra.mxu0 %v656
    %682 = vmatprep.subr.mxu0 0.0
    %683 = vmatpush1.msra.mxu0 %v657
    %684 = vmatprep.subr.mxu0 0.0
    %685 = vmatpush1.msra.mxu0 %v658
    %686 = vmatprep.subr.mxu0 0.0
    %687 = vmatpush1.msra.mxu0 %v659
    %688 = vmatprep.subr.mxu0 0.0
    %689 = vmatpush1.msra.mxu0 %v660
    %690 = vmatprep.subr.mxu0 0.0
    %691 = vmatpush1.msra.mxu0 %v661
    %692 = vmatprep.subr.mxu0 0.0
    %693 = vmatpush1.msra.mxu0 %v662
    %694 = vmatprep.subr.mxu0 0.0
    %695 = vmatpush1.msra.mxu0 %v663
    %696 = vmatprep.subr.mxu0 0.0
    %697 = vmatpush1.msra.mxu0 %v664
    %698 = vmatprep.subr.mxu0 0.0
    %699 = vmatpush1.msra.mxu0 %v665
    %700 = vmatprep.subr.mxu0 0.0
    %701 = vmatpush1.msra.mxu0 %v666
    %702 = vmatprep.subr.mxu0 0.0
    %703 = vmatpush1.msra.mxu0 %v667
    %704 = vmatprep.subr.mxu0 0.0
    %705 = vmatpush1.msra.mxu0 %v668
    %706 = vmatprep.subr.mxu0 0.0
    %707 = vmatpush1.msra.mxu0 %v669
    %708 = vmatprep.subr.mxu0 0.0
    %709 = vmatpush1.msra.mxu0 %v670
    %710 = vmatprep.subr.mxu0 0.0
    %711 = vmatpush1.msra.mxu0 0.0
    %712 = vmatprep.subr.mxu0 0.0
    %713 = vmatpush1.msra.mxu0 0.0
    %714 = vmatprep.subr.mxu0 0.0
    %715 = vmatpush1.msra.mxu0 0.0
    %716 = vmatprep.subr.mxu0 0.0
    %717 = vmatpush1.msra.mxu0 0.0
    %718 = vmatprep.subr.mxu0 0.0
    %719 = vmatpush1.msra.mxu0 0.0
    %720 = vmatprep.subr.mxu0 0.0
    %721 = vmatpush1.msra.mxu0 0.0
    %722 = vmatprep.subr.mxu0 0.0
    %723 = vmatpush1.msra.mxu0 0.0
    %724 = vmatprep.subr.mxu0 0.0
    %725 = vmatpush1.msra.mxu0 0.0
    %726 = vmatprep.subr.mxu0 0.0
    %727 = vmatpush1.msra.mxu0 0.0
    %728 = vmatprep.subr.mxu0 0.0
    %729 = vmatpush1.msra.mxu0 0.0
    %730 = vmatprep.subr.mxu0 0.0
    %731 = vmatpush1.msra.mxu0 0.0
    %732 = vmatprep.subr.mxu0 0.0
    %733 = vmatpush1.msra.mxu0 0.0
    %734 = vmatprep.subr.mxu0 0.0
    %735 = vmatpush1.msra.mxu0 0.0
    %736 = vmatprep.subr.mxu0 0.0
    %737 = vmatpush1.msra.mxu0 0.0
    %738 = vmatprep.subr.mxu0 0.0
    %739 = vmatpush1.msra.mxu0 0.0
    %740 = vmatprep.subr.mxu0 0.0
    %741 = vmatpush1.msra.mxu0 0.0
    %742 = vmatprep.mubr.f32.mxu0 0.0
    %743 = vmatmul.mubr.f32.gmra.mrb[0].mxu0 %v654
    %v744 = vpop.f32.mrb[0].mxu0
    %v745 = vadd.f32 %v676, %v744
    %v746 = vpop.f32.mrb[0].mxu0
    %747 = vdwg.mxu0
    %v748 = vmul.f32 %v745, 0.5
    %v749 = vtanh.pop %v748
    %v750 = vadd.f32 %v749, 1.0
    %v751 = vmul.f32 %v750, 0.5
    %vm752 = vcmask 7168
    %753 = vst.msk [vmem:[%s3] sm:$0xff] %vm752, %v751
    // Predicated region
    $region26: #{tpu_custom_call.1} parent=1 // pred_check
      _
    $region27: #{tpu_custom_call.1} parent=1 // pred_check_branch
      %755 = sbr.rel (0) target = $region29
    $region28: #{tpu_custom_call.1} parent=1 // pred_region
      _
    $region29: #{tpu_custom_call.1} parent=1 // pred_fallthru
      _
    // Predicated region
    $region30: #{tpu_custom_call.1} parent=1 // pred_check
      _
    $region31: #{tpu_custom_call.1} parent=1 // pred_check_branch
      %757 = sbr.rel (0) target = $region33
    $region32: #{tpu_custom_call.1} parent=1 // pred_region
      _
    $region33: #{tpu_custom_call.1} parent=1 // pred_fallthru
      _
    %758 = vsyncpa [#allocation3], 1
    %759 = vsyncpa [#allocation5], 1

</llo_original>
